<compile_context>
chip_gen: v6e
topology: v6e:2x2x1
jax: 0.10.0
libtpu: 0.0.40
codegen_flags: <defaults>
</compile_context>

<pallas_src>
import jax
import jax.numpy as jnp
from jax.experimental import pallas as pl
from jax.experimental.pallas import tpu as pltpu


def _sigmoid_kernel(x_ref, o_ref):
    # exp() goes to the EUP, add/div to the VPU; all hidden under the DMA
    # stream at these tile sizes, so no compute micro-opts needed.
    o_ref[...] = jax.nn.sigmoid(x_ref[...])


_LANES = 1024                 # lane-dense slab width (8 * 128)
_MAX_BLOCK_BYTES = 8 << 20    # hard cap on a single block


def _tpu_tile_params():
    """(tile_bytes, vmem_limit_bytes) sized for the current TPU generation."""
    vmem_cap = None
    try:
        vmem_cap = pltpu.get_tpu_info().vmem_capacity_bytes
    except Exception:
        pass
    if vmem_cap is not None and vmem_cap >= (96 << 20):
        # v5e / v6e class: 128 MiB VMEM -> 4 MiB tiles, 16 MiB in flight.
        return 4 << 20, 64 << 20
    # v7x class (64 MiB VMEM per TC) or unknown: stay under 32 MiB scoped.
    return 4 << 20, 32 << 20


def _fold_cols(shape):
    """Fold trailing dims into a reasonably lane-dense column count (free reshape)."""
    cols = 1
    for d in reversed(shape):
        if cols >= 256:
            break
        cols *= d
    return max(cols, 1)


def _cost(nelems: int, itemsize: int) -> pl.CostEstimate:
    # 1 read + 1 write of everything touched, one transcendental per element.
    return pl.CostEstimate(flops=2 * nelems, transcendentals=nelems,
                           bytes_accessed=2 * nelems * itemsize)


def _run_2d(x2d: jax.Array, tile_bytes: int, vmem_limit: int) -> jax.Array:
    """Stream an elementwise sigmoid over a 2-D view, tiling rows only."""
    rows, cols = x2d.shape
    dtype = x2d.dtype
    itemsize = jnp.dtype(dtype).itemsize

    # Row tile: multiple of 32 (safe for fp32/bf16/int8 sublane packing),
    # sized so one block is ~tile_bytes.
    row_tile = max(32, (tile_bytes // (cols * itemsize)) // 32 * 32)
    if rows <= row_tile:
        row_tile = rows        # single full-extent block (always legal)

    grid = (pl.cdiv(rows, row_tile),)   # partial boundary block masked by Pallas
    nelems = rows * cols

    return pl.pallas_call(
        _sigmoid_kernel,
        out_shape=jax.ShapeDtypeStruct((rows, cols), dtype),
        grid_spec=pl.GridSpec(
            grid=grid,
            in_specs=[pl.BlockSpec((row_tile, cols), lambda i: (i, 0))],
            out_specs=pl.BlockSpec((row_tile, cols), lambda i: (i, 0)),
        ),
        compiler_params=pltpu.CompilerParams(
            dimension_semantics=("parallel",),   # shard across v7x's 2 TCs
            vmem_limit_bytes=vmem_limit,
        ),
        cost_estimate=_cost(nelems, itemsize),
    )(x2d)


def _sigmoid_fallback_padded(x: jax.Array, tile_bytes: int, vmem_limit: int) -> jax.Array:
    # Only reached for pathologically wide ragged trailing dims where even a
    # 32-row block would not fit VMEM.
    # TODO(synk): replace with in-kernel column masking to avoid the extra
    # pad/slice HBM passes on this rare path.
    n = x.size
    flat = x.reshape(-1)
    n_pad = pl.cdiv(n, _LANES) * _LANES
    flat = jnp.pad(flat, (0, n_pad - n))
    out = _run_2d(flat.reshape(-1, _LANES), tile_bytes, vmem_limit)
    return out.reshape(-1)[:n].reshape(x.shape)


def sigmoid_pallas(x: jax.Array) -> jax.Array:
    """Elementwise sigmoid via a Pallas TPU kernel (any shape/dtype, no copies)."""
    n = x.size
    if n == 0:
        return x
    itemsize = jnp.dtype(x.dtype).itemsize
    tile_bytes, vmem_limit = _tpu_tile_params()

    if n % _LANES == 0:
        # Perfectly lane-dense slab; reshape is free (contiguous row-major).
        x2d = x.reshape(-1, _LANES)
    else:
        # Ragged total size: collapse trailing dims (free reshape); the block's
        # last dim equals the full column extent, so it is always legal and
        # Pallas masks any partial boundary row-block — no pad, no slice.
        cols = _fold_cols(x.shape)
        x2d = x.reshape(-1, cols)
        min_block = min(x2d.shape[0], 32) * cols * itemsize
        if min_block > _MAX_BLOCK_BYTES:
            return _sigmoid_fallback_padded(x, tile_bytes, vmem_limit)

    return _run_2d(x2d, tile_bytes, vmem_limit).reshape(x.shape)


class MyNetworkPallas:
    """JAX/Pallas equivalent of the PyTorch MyNetwork (Sigmoid only).

    MyNetwork.__init__ has no parameters (just nn.Sigmoid), so there is
    nothing to initialize.
    """

    def __call__(self, x: jax.Array) -> jax.Array:
        return sigmoid_pallas(x)


if __name__ == "__main__":
    net = MyNetworkPallas()

    # Main example input (NCHW image-style), aligned small path: (2,1024) slab.
    x = jax.random.normal(jax.random.PRNGKey(0), (2, 4, 16, 16), dtype=jnp.float32)
    out = jax.block_until_ready(net(x))
    assert out.shape == x.shape and out.dtype == x.dtype
    assert jnp.allclose(out, jax.nn.sigmoid(x), atol=1e-6), "mismatch vs reference"

    # Torch-spec-like reshape (-1, 1, 2, 2): tiny ragged case.
    x_tiny = jax.random.normal(jax.random.PRNGKey(1), (4, 1, 2, 2), dtype=jnp.float32)
    out_tiny = jax.block_until_ready(net(x_tiny))
    assert jnp.allclose(out_tiny, jax.nn.sigmoid(x_tiny), atol=1e-6), "tiny mismatch"

    # Aligned multi-step grid path (rows > row_tile).
    x_big = jax.random.normal(jax.random.PRNGKey(2), (8, 256, 1024), dtype=jnp.float32)
    out_big = jax.block_until_ready(net(x_big))
    assert jnp.allclose(out_big, jax.nn.sigmoid(x_big), atol=1e-5), "aligned mismatch"

    # Ragged multi-step grid path: no pad/slice, boundary block masked by Pallas.
    x_rag = jax.random.normal(jax.random.PRNGKey(3), (3, 700, 1000), dtype=jnp.float32)
    out_rag = jax.block_until_ready(net(x_rag))
    assert jnp.allclose(out_rag, jax.nn.sigmoid(x_rag), atol=1e-5), "ragged mismatch"

    print("KERNEL_OK")
</pallas_src>

<mosaic_0001>
module attributes {stable_mosaic.version = 11 : i64} {
  func.func @_sigmoid_kernel(%arg0: i32, %arg1: memref<2x1024xf32, #tpu.memory_space<vmem>>, %arg2: memref<2x1024xf32, #tpu.memory_space<vmem>>) attributes {dimension_semantics = [#tpu.dimension_semantics<parallel>], iteration_bounds = array<i64: 1>, scalar_prefetch = 0 : i64, scratch_operands = 0 : i64, tpu.core_type = #tpu.core_type<tc>, window_params = [{transform_indices = @transform_0, window_bounds = array<i64: 2, 1024>}, {transform_indices = @transform_1, window_bounds = array<i64: 2, 1024>}]} {
    %c0 = arith.constant 0 : index
    %c0_0 = arith.constant 0 : index
    %0 = vector.load %arg1[%c0, %c0_0] : memref<2x1024xf32, #tpu.memory_space<vmem>>, vector<2x1024xf32>
    %1 = arith.negf %0 : vector<2x1024xf32>
    %2 = math.exp %1 : vector<2x1024xf32>
    %cst = arith.constant 1.000000e+00 : f32
    %3 = vector.broadcast %cst : f32 to vector<2x1024xf32>
    %4 = arith.addf %3, %2 : vector<2x1024xf32>
    %5 = arith.divf %3, %4 : vector<2x1024xf32>
    %c0_1 = arith.constant 0 : index
    %c0_2 = arith.constant 0 : index
    %6 = vector.load %arg2[%c0_1, %c0_2] : memref<2x1024xf32, #tpu.memory_space<vmem>>, vector<2x1024xf32>
    tpu.vector_store %arg2[%c0_1, %c0_2], %5 {strides = array<i32>} : memref<2x1024xf32, #tpu.memory_space<vmem>>, vector<2x1024xf32>,
    return
  }
  func.func @transform_0(%arg0: i32) -> (i32, i32) {
    %c0_i32 = arith.constant 0 : i32
    %c0_i32_0 = arith.constant 0 : i32
    return %arg0, %c0_i32 : i32, i32
  }
  func.func @transform_1(%arg0: i32) -> (i32, i32) {
    %c0_i32 = arith.constant 0 : i32
    %c0_i32_0 = arith.constant 0 : i32
    return %arg0, %c0_i32 : i32, i32
  }
}

</mosaic_0001>

<llo_original>
// kernel: tpu_custom_call.1
$region0: #{tpu_custom_call.1}
  #allocation0 [shape = 'u32[]', space=smem, size = 0x4, offset = 0x4, fixed_abs, tag = 'smem constant byte address 0x4 - core index']
  #allocation1 [shape = 'u32[144,128]{1,0:T(1,128)}', space=vmem, size = 0x12000, scoped, tag = 'internal scratch']
  %s0 = inlined_call_operand.hbm [shape: f32[2,1024], index: 0, kind: input, shape index: {}]
  %s1 = inlined_call_operand.hbm [shape: f32[2,1024], index: 1, kind: output, shape index: {}]
  %s2 = sld [smem:[#allocation0]]
  $region18: #{tpu_custom_call.1} parent=0
    _
  %s4 = ssub.s32 1, %s2
  %s5 = scalar_select 0, %s4, %s2
  $region1: #{tpu_custom_call.1} parent=0
    #allocation2 [shape = 'u8[8192]{0}', space=vmem, size = 0x2000, scoped, tag = 'input window, operand 0, single buffered']
    #allocation3 [shape = 's32[1]{0}', space=sflag, size = 0x4, scoped, tag = 'scoped memory for tpu_custom_call.1']
    #allocation4 [shape = 's32[1]{0}', space=sflag, size = 0x4, scoped, tag = 'scoped memory for tpu_custom_call.1']
    #allocation5 [shape = 'u8[8192]{0}', space=vmem, size = 0x2000, scoped, tag = 'output window, operand 0, single buffered']
    %6 = vsyncpa [#allocation3], 0
    %7 = vsyncpa [#allocation4], 0
    // Predicated region
    $region2: #{tpu_custom_call.1} parent=1 // pred_check
      _
    $region3: #{tpu_custom_call.1} parent=1 // pred_check_branch
      %9 = sbr.rel (0) target = $region5
    $region4: #{tpu_custom_call.1} parent=1 // pred_region
      %s11 = ssub.s32 256, 256
      %12 = vsyncadd [#allocation3], %s11
      %s14 = sshll.u32 [#allocation2], 4
      %s15 = int_to_ptr.vmem [resolvable:$true] %s14
      %17 = dma.hbm_to_vmem [thread:$0]  %s0, 256, %s15, [#allocation3]
    $region5: #{tpu_custom_call.1} parent=1 // pred_fallthru
      _
    // Predicated region
    $region6: #{tpu_custom_call.1} parent=1 // pred_check
      _
    $region7: #{tpu_custom_call.1} parent=1 // pred_check_branch
      %19 = sbr.rel (0) target = $region9
    $region8: #{tpu_custom_call.1} parent=1 // pred_region
      %20 = dma.done [#allocation3], 256
    $region9: #{tpu_custom_call.1} parent=1 // pred_fallthru
      _
    %v21 = vld [vmem:[#allocation2] sm:$0xff]
    %v22 = vld [vmem:[#allocation2 + $0x8] sm:$0xff]
    %v23 = vxor.u32 %v21, 2147483648
    %v24 = vxor.u32 %v22, 2147483648
    %v25 = vmul.f32 %v23, 1.442695
    %v26 = vpow.pop %v25
    %v27 = vmul.f32 %v24, 1.442695
    %v28 = vpow.pop %v27
    %v29 = vadd.f32 %v26, 1.0
    %v30 = vadd.f32 %v28, 1.0
    %v31 = vrcp.pop %v29
    %v32 = vmul.f32 1.0, %v31
    %v33 = vrcp.pop %v30
    %v34 = vmul.f32 1.0, %v33
    %35 = vst [vmem:[#allocation5] sm:$0xff] %v32
    %36 = vst [vmem:[#allocation5 + $0x8] sm:$0xff] %v34
    // Predicated region
    $region10: #{tpu_custom_call.1} parent=1 // pred_check
      _
    $region11: #{tpu_custom_call.1} parent=1 // pred_check_branch
      %38 = sbr.rel (0) target = $region13
    $region12: #{tpu_custom_call.1} parent=1 // pred_region
      %s40 = ssub.s32 256, 256
      %41 = vsyncadd [#allocation4], %s40
      %s43 = sshll.u32 [#allocation5], 4
      %s44 = int_to_ptr.vmem [resolvable:$true] %s43
      %46 = dma.vmem_to_hbm [thread:$0]  %s44, 256, %s1, [#allocation4]
    $region13: #{tpu_custom_call.1} parent=1 // pred_fallthru
      _
    // Predicated region
    $region14: #{tpu_custom_call.1} parent=1 // pred_check
      _
    $region15: #{tpu_custom_call.1} parent=1 // pred_check_branch
      %48 = sbr.rel (0) target = $region17
    $region16: #{tpu_custom_call.1} parent=1 // pred_region
      %49 = dma.done [#allocation4], 256
    $region17: #{tpu_custom_call.1} parent=1 // pred_fallthru
      _
    %50 = vsyncpa [#allocation3], 1
    %51 = vsyncpa [#allocation4], 1

</llo_original>
